<compile_context>
chip_gen: v7x
topology: tpu7x:2x2x1
jax: 0.10.0
libtpu: 0.0.40
codegen_flags: <defaults>
</compile_context>

<pallas_src>
import functools

import jax
import jax.numpy as jnp
from jax.experimental import pallas as pl
from jax.experimental.pallas import tpu as pltpu


def _round_up(x: int, m: int) -> int:
    return (x + m - 1) // m * m


def _pick_tm(m: int, tm_max: int = 512) -> int:
    """Adaptive M tile: minimizes padding waste while capping tile size."""
    n_blocks = -(-m // tm_max)              # ceil
    return _round_up(-(-m // n_blocks), 8)  # ceil(m / n_blocks) rounded to 8


def _pick_tile(dim_pad: int, candidates) -> int:
    for c in candidates:
        if dim_pad % c == 0:
            return c
    return 128


# ----------------------------------------------------------------------------
# Kernels
# ----------------------------------------------------------------------------
def _qkv_resident_kernel(x_ref, w_ref, o_ref):
    # Weight block is VMEM-resident (constant index_map -> DMA'd once).
    # Single dot over the full K; MXU accumulates in f32.
    o_ref[...] = jnp.dot(
        x_ref[...], w_ref[...], preferred_element_type=jnp.float32
    ).astype(o_ref.dtype)


def _qkv_tiled_kernel(x_ref, w_ref, o_ref, acc_ref):
    # (i, j, k) grid, K innermost; f32 accumulator in VMEM.
    @pl.when(pl.program_id(2) == 0)
    def _():
        acc_ref[...] = jnp.zeros_like(acc_ref)

    acc_ref[...] += jnp.dot(
        x_ref[...], w_ref[...], preferred_element_type=jnp.float32
    )

    @pl.when(pl.program_id(2) == pl.num_programs(2) - 1)
    def _():
        o_ref[...] = acc_ref[...].astype(o_ref.dtype)


def _qkv_tiled_single_k_kernel(x_ref, w_ref, o_ref):
    # Single K step: no accumulator scratch, write straight to output.
    o_ref[...] = jnp.dot(
        x_ref[...], w_ref[...], preferred_element_type=jnp.float32
    ).astype(o_ref.dtype)


# ----------------------------------------------------------------------------
# One-time weight preparation (do this at parameter-load time, NOT per call)
# ----------------------------------------------------------------------------
def prepare_qkv_weight(weight, *, compute_dtype=jnp.bfloat16):
    """Cast, transpose (out,in) -> (in,out) and pad to (8,128)-tile multiples.

    Returns an array of shape (K_pad, N_pad) in `compute_dtype`, ready to be
    fed to `fused_qkv`.  Call once and cache alongside the model params.
    """
    n_out, k_in = weight.shape
    k_pad = _round_up(k_in, 128)
    n_pad = _round_up(n_out, 128)
    w = weight.astype(compute_dtype).T  # (K, N)
    if (k_pad, n_pad) != (k_in, n_out):
        w = jnp.pad(w, ((0, k_pad - k_in), (0, n_pad - n_out)))
    return w


# ----------------------------------------------------------------------------
# Forward
# ----------------------------------------------------------------------------
@functools.partial(
    jax.jit,
    static_argnames=(
        "num_q_heads",
        "q_head_dim",
        "num_kv_heads",
        "kv_head_dim",
        "weight_resident",
    ),
)
def fused_qkv(
    inputs,        # (..., in_features)
    w_kn,          # (K_pad, N_pad) prepared weight from prepare_qkv_weight()
    *,
    num_q_heads,
    q_head_dim,
    num_kv_heads,
    kv_head_dim,
    weight_resident=None,  # None = auto, True/False = force path
):
    q_output_dim = num_q_heads * q_head_dim
    kv_output_dim = num_kv_heads * kv_head_dim
    n_feat = q_output_dim + 2 * kv_output_dim

    *lead, k_in = inputs.shape
    k_pad, n_pad = w_kn.shape
    assert k_pad == _round_up(k_in, 128), "weight K padding mismatch"
    assert n_pad == _round_up(n_feat, 128), "weight N padding mismatch"

    out_dtype = inputs.dtype
    compute_dtype = w_kn.dtype
    itemsize_c = jnp.dtype(compute_dtype).itemsize
    itemsize_o = jnp.dtype(out_dtype).itemsize

    m = 1
    for d in lead:
        m *= d
    x2d = inputs.reshape(m, k_in).astype(compute_dtype)

    w_bytes = k_pad * n_pad * itemsize_c

    # -------------------- decide path --------------------
    tm = _pick_tm(m, 512)
    m_pad = _round_up(m, tm)
    n_m = m_pad // tm

    # Conservative VMEM estimate for the resident path (double buffers for x
    # and out, 2x on the weight in case Pallas double-buffers it too).
    resident_vmem = (
        2 * w_bytes
        + 2 * tm * k_pad * itemsize_c
        + 2 * tm * n_pad * itemsize_o
    )
    vmem_budget = 40 * 1024 * 1024  # sized for v7x's 64 MiB with headroom
    auto_resident = resident_vmem <= vmem_budget
    use_resident = auto_resident if weight_resident is None else bool(weight_resident)

    if m_pad > m or k_pad > k_in:
        x2d = jnp.pad(x2d, ((0, m_pad - m), (0, k_pad - k_in)))

    if use_resident:
        # ---------------- Path A: weight resident in VMEM ----------------
        # Grid is (N panels, M blocks) with M innermost, so each weight panel's
        # block index is constant across the inner loop -> fetched from HBM
        # exactly once.  Normally tn == N_pad (single panel, x streamed once);
        # when M collapses to a single tile we split N into 2 panels so both
        # v7x TensorCores get work.
        if n_m >= 2 or n_pad % 256 != 0:
            tn = n_pad
        else:
            tn = n_pad // 2
        n_n = n_pad // tn

        cost = pl.CostEstimate(
            flops=2 * m_pad * k_pad * n_pad,
            transcendentals=0,
            bytes_accessed=(
                n_n * m_pad * k_pad * itemsize_c   # activations (re-streamed per N panel)
                + k_pad * n_pad * itemsize_c       # weight, fetched once
                + m_pad * n_pad * itemsize_o       # output
            ),
        )

        out2d = pl.pallas_call(
            _qkv_resident_kernel,
            out_shape=jax.ShapeDtypeStruct((m_pad, n_pad), out_dtype),
            grid_spec=pltpu.PrefetchScalarGridSpec(
                num_scalar_prefetch=0,
                grid=(n_n, n_m),
                in_specs=[
                    pl.BlockSpec((tm, k_pad), lambda j, i: (i, 0)),   # activations
                    pl.BlockSpec((k_pad, tn), lambda j, i: (0, j)),   # resident weight panel
                ],
                out_specs=pl.BlockSpec((tm, tn), lambda j, i: (i, j)),
            ),
            compiler_params=pltpu.CompilerParams(
                dimension_semantics=("parallel", "parallel"),
                vmem_limit_bytes=48 * 1024 * 1024,
            ),
            cost_estimate=cost,
        )(x2d, w_kn)

    else:
        # ---------------- Path B: tiled (weight too large for VMEM) -------
        tn = _pick_tile(n_pad, (512, 256, 128))
        tk = _pick_tile(k_pad, (1024, 512, 256, 128))
        n_n = n_pad // tn
        n_k = k_pad // tk

        cost = pl.CostEstimate(
            flops=2 * m_pad * k_pad * n_pad,
            transcendentals=0,
            bytes_accessed=(
                n_n * m_pad * k_pad * itemsize_c     # x re-streamed per N block
                + n_m * k_pad * n_pad * itemsize_c   # W re-streamed per M block
                + m_pad * n_pad * itemsize_o
            ),
        )

        if n_k == 1:
            out2d = pl.pallas_call(
                _qkv_tiled_single_k_kernel,
                out_shape=jax.ShapeDtypeStruct((m_pad, n_pad), out_dtype),
                grid_spec=pltpu.PrefetchScalarGridSpec(
                    num_scalar_prefetch=0,
                    grid=(n_m, n_n),
                    in_specs=[
                        pl.BlockSpec((tm, tk), lambda i, j: (i, 0)),
                        pl.BlockSpec((tk, tn), lambda i, j: (0, j)),
                    ],
                    out_specs=pl.BlockSpec((tm, tn), lambda i, j: (i, j)),
                ),
                compiler_params=pltpu.CompilerParams(
                    dimension_semantics=("parallel", "parallel"),
                    vmem_limit_bytes=32 * 1024 * 1024,
                ),
                cost_estimate=cost,
            )(x2d, w_kn)
        else:
            out2d = pl.pallas_call(
                _qkv_tiled_kernel,
                out_shape=jax.ShapeDtypeStruct((m_pad, n_pad), out_dtype),
                grid_spec=pltpu.PrefetchScalarGridSpec(
                    num_scalar_prefetch=0,
                    grid=(n_m, n_n, n_k),
                    in_specs=[
                        pl.BlockSpec((tm, tk), lambda i, j, k: (i, k)),
                        pl.BlockSpec((tk, tn), lambda i, j, k: (k, j)),
                    ],
                    out_specs=pl.BlockSpec((tm, tn), lambda i, j, k: (i, j)),
                    scratch_shapes=[pltpu.VMEM((tm, tn), jnp.float32)],
                ),
                compiler_params=pltpu.CompilerParams(
                    dimension_semantics=("parallel", "parallel", "arbitrary"),
                    vmem_limit_bytes=32 * 1024 * 1024,
                ),
                cost_estimate=cost,
            )(x2d, w_kn)

    # -------------------- split + head reshape (metadata only) --------------
    x = out2d[:m, :n_feat].reshape(*lead, n_feat)
    q = x[..., :q_output_dim].reshape(*lead, num_q_heads, q_head_dim)
    k = x[..., q_output_dim:q_output_dim + kv_output_dim].reshape(
        *lead, num_kv_heads, kv_head_dim)
    v = x[..., q_output_dim + kv_output_dim:].reshape(
        *lead, num_kv_heads, kv_head_dim)
    return q, k, v


if __name__ == "__main__":
    # Small shapes consistent with the module's forward:
    #   in_features=32, num_q_heads=4, q_head_dim=8  -> q_output_dim=32
    #   num_kv_heads=2, kv_head_dim=8                -> kv_output_dim=16
    #   out_features = 32 + 16 + 16 = 64
    B, S, in_features = 2, 8, 32
    num_q_heads, q_head_dim = 4, 8
    num_kv_heads, kv_head_dim = 2, 8
    out_features = num_q_heads * q_head_dim + 2 * num_kv_heads * kv_head_dim

    key = jax.random.PRNGKey(0)
    k_x, k_w, k_x2, k_w2 = jax.random.split(key, 4)
    x = jax.random.normal(k_x, (B, S, in_features), dtype=jnp.float32)
    weight = jax.random.normal(
        k_w, (out_features, in_features), dtype=jnp.float32
    ) * (1.0 / jnp.sqrt(in_features))

    head_kwargs = dict(
        num_q_heads=num_q_heads, q_head_dim=q_head_dim,
        num_kv_heads=num_kv_heads, kv_head_dim=kv_head_dim,
    )

    # Pure-JAX reference of the module semantics.
    ref = jnp.einsum("bsi,oi->bso", x, weight)
    q_ref = ref[..., :32].reshape(B, S, num_q_heads, q_head_dim)
    k_ref = ref[..., 32:48].reshape(B, S, num_kv_heads, kv_head_dim)
    v_ref = ref[..., 48:].reshape(B, S, num_kv_heads, kv_head_dim)

    # 1) Exact f32 path (weight-resident).
    w_f32 = prepare_qkv_weight(weight, compute_dtype=jnp.float32)
    q, k, v = fused_qkv(x, w_f32, **head_kwargs)
    jax.block_until_ready((q, k, v))
    assert q.shape == (B, S, num_q_heads, q_head_dim)
    assert k.shape == (B, S, num_kv_heads, kv_head_dim)
    assert v.shape == (B, S, num_kv_heads, kv_head_dim)
    assert jnp.allclose(q, q_ref, atol=1e-5, rtol=1e-5)
    assert jnp.allclose(k, k_ref, atol=1e-5, rtol=1e-5)
    assert jnp.allclose(v, v_ref, atol=1e-5, rtol=1e-5)

    # 2) Default bf16 compute (f32 accumulation) -- the recommended deployment
    #    configuration; loose tolerance for the bf16 input rounding.
    w_bf16 = prepare_qkv_weight(weight)  # compute_dtype=bfloat16 by default
    qb, kb, vb = fused_qkv(x, w_bf16, **head_kwargs)
    jax.block_until_ready((qb, kb, vb))
    assert jnp.allclose(qb, q_ref, atol=5e-2, rtol=5e-2)
    assert jnp.allclose(kb, k_ref, atol=5e-2, rtol=5e-2)
    assert jnp.allclose(vb, v_ref, atol=5e-2, rtol=5e-2)

    # 3) Forced tiled path with K-accumulation (in_features=384 -> 3 K steps),
    #    exercising the f32-accumulator kernel, in f32 for an exact check.
    in2 = 384
    x2 = jax.random.normal(k_x2, (B, S, in2), dtype=jnp.float32)
    w2 = jax.random.normal(
        k_w2, (out_features, in2), dtype=jnp.float32
    ) * (1.0 / jnp.sqrt(in2))
    w2_prep = prepare_qkv_weight(w2, compute_dtype=jnp.float32)
    q2, k2, v2 = fused_qkv(x2, w2_prep, **head_kwargs, weight_resident=False)
    jax.block_until_ready((q2, k2, v2))
    ref2 = jnp.einsum("bsi,oi->bso", x2, w2)
    q2_ref = ref2[..., :32].reshape(B, S, num_q_heads, q_head_dim)
    k2_ref = ref2[..., 32:48].reshape(B, S, num_kv_heads, kv_head_dim)
    v2_ref = ref2[..., 48:].reshape(B, S, num_kv_heads, kv_head_dim)
    assert jnp.allclose(q2, q2_ref, atol=1e-4, rtol=1e-4)
    assert jnp.allclose(k2, k2_ref, atol=1e-4, rtol=1e-4)
    assert jnp.allclose(v2, v2_ref, atol=1e-4, rtol=1e-4)

    print("KERNEL_OK")
</pallas_src>

<mosaic_0001>
module attributes {stable_mosaic.version = 11 : i64} {
  func.func @_qkv_resident_kernel(%arg0: i32, %arg1: i32, %arg2: memref<16x128xf32, #tpu.memory_space<vmem>>, %arg3: memref<128x128xf32, #tpu.memory_space<vmem>>, %arg4: memref<16x128xf32, #tpu.memory_space<vmem>>) attributes {dimension_semantics = [#tpu.dimension_semantics<parallel>, #tpu.dimension_semantics<parallel>], iteration_bounds = array<i64: 1, 1>, scalar_prefetch = 0 : i64, scratch_operands = 0 : i64, tpu.core_type = #tpu.core_type<tc>, window_params = [{transform_indices = @transform_0, window_bounds = array<i64: 16, 128>}, {transform_indices = @transform_1, window_bounds = array<i64: 128, 128>}, {transform_indices = @transform_2, window_bounds = array<i64: 16, 128>}]} {
    %c0 = arith.constant 0 : index
    %c0_0 = arith.constant 0 : index
    %0 = vector.load %arg2[%c0, %c0_0] : memref<16x128xf32, #tpu.memory_space<vmem>>, vector<16x128xf32>
    %c0_1 = arith.constant 0 : index
    %c0_2 = arith.constant 0 : index
    %1 = vector.load %arg3[%c0_1, %c0_2] : memref<128x128xf32, #tpu.memory_space<vmem>>, vector<128x128xf32>
    %cst = arith.constant dense<0.000000e+00> : vector<16x128xf32>
    %2 = tpu.matmul %0, %1, %cst {dimension_numbers = #tpu.dot_dimension_numbers<[1], [0], [0], [1], [0, 0, 1, 1], [], []>} : vector<16x128xf32>, vector<128x128xf32>, vector<16x128xf32> -> vector<16x128xf32>
    %c0_3 = arith.constant 0 : index
    %c0_4 = arith.constant 0 : index
    %3 = vector.load %arg4[%c0_3, %c0_4] : memref<16x128xf32, #tpu.memory_space<vmem>>, vector<16x128xf32>
    tpu.vector_store %arg4[%c0_3, %c0_4], %2 {strides = array<i32>} : memref<16x128xf32, #tpu.memory_space<vmem>>, vector<16x128xf32>,
    return
  }
  func.func @transform_0(%arg0: i32, %arg1: i32) -> (i32, i32) {
    %c0_i32 = arith.constant 0 : i32
    %c0_i32_0 = arith.constant 0 : i32
    return %arg1, %c0_i32 : i32, i32
  }
  func.func @transform_1(%arg0: i32, %arg1: i32) -> (i32, i32) {
    %c0_i32 = arith.constant 0 : i32
    %c0_i32_0 = arith.constant 0 : i32
    return %c0_i32, %arg0 : i32, i32
  }
  func.func @transform_2(%arg0: i32, %arg1: i32) -> (i32, i32) {
    %c0_i32 = arith.constant 0 : i32
    return %arg1, %arg0 : i32, i32
  }
}

</mosaic_0001>

<llo_original>
// kernel: fused_qkv.1
$region0: #{fused_qkv.1}
  #allocation0 [shape = 'u32[]', space=smem, size = 0x4, offset = 0x4, fixed_abs, tag = 'smem constant byte address 0x4 - core index']
  #allocation1 [shape = 'u32[144,128]{1,0:T(1,128)}', space=vmem, size = 0x12000, scoped, tag = 'internal scratch']
  %s0 = inlined_call_operand.vmem [shape: f32[16,128], index: 0, kind: input, shape index: {}]
  %s1 = inlined_call_operand.hbm [shape: f32[128,128], index: 1, kind: input, shape index: {}]
  %s2 = inlined_call_operand.vmem [shape: f32[16,128], index: 2, kind: output, shape index: {}]
  %s3 = sld [smem:[#allocation0]]
  $region22: #{fused_qkv.1} parent=0
    _
  %s5 = ssub.s32 1, %s3
  %s6 = scalar_select 0, %s5, %s3
  $region1: #{fused_qkv.1} parent=0
    #allocation2 [shape = 'u8[65536]{0}', space=vmem, size = 0x10000, scoped, tag = 'input window, operand 1, single buffered']
    #allocation3 [shape = 's32[1]{0}', space=sflag, size = 0x4, scoped, tag = 'scoped memory for fused_qkv.1']
    %7 = vsyncpa [#allocation3], 0
    // Predicated region
    $region2: #{fused_qkv.1} parent=1 // pred_check
      _
    $region3: #{fused_qkv.1} parent=1 // pred_check_branch
      %9 = sbr.rel (0) target = $region5
    $region4: #{fused_qkv.1} parent=1 // pred_region
      _
    $region5: #{fused_qkv.1} parent=1 // pred_fallthru
      _
    // Predicated region
    $region6: #{fused_qkv.1} parent=1 // pred_check
      _
    $region7: #{fused_qkv.1} parent=1 // pred_check_branch
      %11 = sbr.rel (0) target = $region9
    $region8: #{fused_qkv.1} parent=1 // pred_region
      %s13 = ssub.s32 2048, 2048
      %14 = vsyncadd [#allocation3], %s13
      %s15 = sshll.u32 [#allocation2], 4
      %s16 = int_to_ptr.vmem [resolvable:$true] %s15
      %21 = dma.hbm_to_vmem [thread:$0]  %s1, 2048, %s16, [#allocation3], 128, 128, 8
    $region9: #{fused_qkv.1} parent=1 // pred_fallthru
      _
    // Predicated region
    $region10: #{fused_qkv.1} parent=1 // pred_check
      _
    $region11: #{fused_qkv.1} parent=1 // pred_check_branch
      %23 = sbr.rel (0) target = $region13
    $region12: #{fused_qkv.1} parent=1 // pred_region
      %24 = dma.done [#allocation3], 2048
    $region13: #{fused_qkv.1} parent=1 // pred_fallthru
      _
    %v25 = vld [vmem:[%s0] sm:$0xff]
    %v26 = vld [vmem:[%s0 + $0x8] sm:$0xff]
    %v27 = vld [vmem:[#allocation2] sm:$0xff]
    %v28 = vld [vmem:[#allocation2 + $0x8] sm:$0xff]
    %v29 = vld [vmem:[#allocation2 + $0x10] sm:$0xff]
    %v30 = vld [vmem:[#allocation2 + $0x18] sm:$0xff]
    %v31 = vld [vmem:[#allocation2 + $0x20] sm:$0xff]
    %v32 = vld [vmem:[#allocation2 + $0x28] sm:$0xff]
    %v33 = vld [vmem:[#allocation2 + $0x30] sm:$0xff]
    %v34 = vld [vmem:[#allocation2 + $0x38] sm:$0xff]
    %v35 = vld [vmem:[#allocation2 + $0x40] sm:$0xff]
    %v36 = vld [vmem:[#allocation2 + $0x48] sm:$0xff]
    %v37 = vld [vmem:[#allocation2 + $0x50] sm:$0xff]
    %v38 = vld [vmem:[#allocation2 + $0x58] sm:$0xff]
    %v39 = vld [vmem:[#allocation2 + $0x60] sm:$0xff]
    %v40 = vld [vmem:[#allocation2 + $0x68] sm:$0xff]
    %v41 = vld [vmem:[#allocation2 + $0x70] sm:$0xff]
    %v42 = vld [vmem:[#allocation2 + $0x78] sm:$0xff]
    %43 = vmatprep.subr.mxu0 0.0
    %44 = vmatpush1.msra.mxu0 %v27
    %45 = vmatprep.subr.mxu0 0.0
    %46 = vmatpush1.msra.mxu0 %v28
    %47 = vmatprep.subr.mxu0 0.0
    %48 = vmatpush1.msra.mxu0 %v29
    %49 = vmatprep.subr.mxu0 0.0
    %50 = vmatpush1.msra.mxu0 %v30
    %51 = vmatprep.subr.mxu0 0.0
    %52 = vmatpush1.msra.mxu0 %v31
    %53 = vmatprep.subr.mxu0 0.0
    %54 = vmatpush1.msra.mxu0 %v32
    %55 = vmatprep.subr.mxu0 0.0
    %56 = vmatpush1.msra.mxu0 %v33
    %57 = vmatprep.subr.mxu0 0.0
    %58 = vmatpush1.msra.mxu0 %v34
    %59 = vmatprep.subr.mxu0 0.0
    %60 = vmatpush1.msra.mxu0 %v35
    %61 = vmatprep.subr.mxu0 0.0
    %62 = vmatpush1.msra.mxu0 %v36
    %63 = vmatprep.subr.mxu0 0.0
    %64 = vmatpush1.msra.mxu0 %v37
    %65 = vmatprep.subr.mxu0 0.0
    %66 = vmatpush1.msra.mxu0 %v38
    %67 = vmatprep.subr.mxu0 0.0
    %68 = vmatpush1.msra.mxu0 %v39
    %69 = vmatprep.subr.mxu0 0.0
    %70 = vmatpush1.msra.mxu0 %v40
    %71 = vmatprep.subr.mxu0 0.0
    %72 = vmatpush1.msra.mxu0 %v41
    %73 = vmatprep.subr.mxu0 0.0
    %74 = vmatpush1.msra.mxu0 %v42
    %75 = vmatprep.subr.mxu0 0.0
    %76 = vmatpush1.msra.mxu0 0.0
    %77 = vmatprep.subr.mxu0 0.0
    %78 = vmatpush1.msra.mxu0 0.0
    %79 = vmatprep.subr.mxu0 0.0
    %80 = vmatpush1.msra.mxu0 0.0
    %81 = vmatprep.subr.mxu0 0.0
    %82 = vmatpush1.msra.mxu0 0.0
    %83 = vmatprep.subr.mxu0 0.0
    %84 = vmatpush1.msra.mxu0 0.0
    %85 = vmatprep.subr.mxu0 0.0
    %86 = vmatpush1.msra.mxu0 0.0
    %87 = vmatprep.subr.mxu0 0.0
    %88 = vmatpush1.msra.mxu0 0.0
    %89 = vmatprep.subr.mxu0 0.0
    %90 = vmatpush1.msra.mxu0 0.0
    %91 = vmatprep.subr.mxu0 0.0
    %92 = vmatpush1.msra.mxu0 0.0
    %93 = vmatprep.subr.mxu0 0.0
    %94 = vmatpush1.msra.mxu0 0.0
    %95 = vmatprep.subr.mxu0 0.0
    %96 = vmatpush1.msra.mxu0 0.0
    %97 = vmatprep.subr.mxu0 0.0
    %98 = vmatpush1.msra.mxu0 0.0
    %99 = vmatprep.subr.mxu0 0.0
    %100 = vmatpush1.msra.mxu0 0.0
    %101 = vmatprep.subr.mxu0 0.0
    %102 = vmatpush1.msra.mxu0 0.0
    %103 = vmatprep.subr.mxu0 0.0
    %104 = vmatpush1.msra.mxu0 0.0
    %105 = vmatprep.subr.mxu0 0.0
    %106 = vmatpush1.msra.mxu0 0.0
    %107 = vmatprep.mubr.f32.mxu0 0.0
    %108 = vmatmul.mubr.f32.gmra.mrb[0].mxu0 %v25
    %v109 = vpop.f32.mrb[0].mxu0
    %v110 = vadd.f32 0.0, %v109
    %v111 = vpop.f32.mrb[0].mxu0
    %112 = vmatprep.mubr.f32.mxu0 0.0
    %113 = vmatmul.mubr.f32.gmra.mrb[0].mxu0 %v26
    %v114 = vpop.f32.mrb[0].mxu0
    %v115 = vadd.f32 0.0, %v114
    %v116 = vpop.f32.mrb[0].mxu0
    %117 = vdwg.mxu0
    %118 = vst [vmem:[%s2] sm:$0xff] %v110
    %119 = vst [vmem:[%s2 + $0x8] sm:$0xff] %v115
    // Predicated region
    $region14: #{fused_qkv.1} parent=1 // pred_check
      _
    $region15: #{fused_qkv.1} parent=1 // pred_check_branch
      %121 = sbr.rel (0) target = $region17
    $region16: #{fused_qkv.1} parent=1 // pred_region
      _
    $region17: #{fused_qkv.1} parent=1 // pred_fallthru
      _
    // Predicated region
    $region18: #{fused_qkv.1} parent=1 // pred_check
      _
    $region19: #{fused_qkv.1} parent=1 // pred_check_branch
      %123 = sbr.rel (0) target = $region21
    $region20: #{fused_qkv.1} parent=1 // pred_region
      _
    $region21: #{fused_qkv.1} parent=1 // pred_fallthru
      _
    %124 = vsyncpa [#allocation3], 1

</llo_original>
